<compile_context>
chip_gen: v7x
topology: tpu7x:2x2x1
jax: 0.10.0
libtpu: 0.0.40
codegen_flags: <defaults>
</compile_context>

<pallas_src>
import jax
import jax.numpy as jnp
from jax.experimental import pallas as pl
from jax.experimental.pallas import tpu as pltpu

NUM_CLASSES = 100
NUM_FEATURES = 2


def _round_up(n, m):
    return ((n + m - 1) // m) * m


def toy_linear_kernel(m_ref, b_ref, x_ref, o_ref):
    # m_ref: (C, C)   fused W.T @ W, grid-invariant resident block
    # b_ref: (C, 1)   bias column, grid-invariant resident block
    # x_ref: (C, TB)  batch tile of x (native orientation, batch on lanes)
    # o_ref: (C, TB)  output tile (native orientation)
    o_ref[...] = (
        jnp.dot(m_ref[...], x_ref[...], preferred_element_type=jnp.float32)
        + b_ref[...]
    )


def toy_model_linear(weights, x, bias, *, batch_tile=2048):
    F, C = weights.shape
    C2, B = x.shape
    assert C == C2 and bias.shape == (C, 1)

    # Fuse W.T @ (W @ x) into one tiny (C, C) operand (one-off wrapper op;
    # hoist this out of the hot path if the weights are static).
    M = (weights.T @ weights).astype(jnp.float32)
    bias = bias.astype(jnp.float32)
    x = x.astype(jnp.float32)

    # Batch (lane-axis) tiling:
    #   * B <= batch_tile: one full-extent block (legal for any B, no padding).
    #   * otherwise: balanced, 128-aligned tiles so the ragged last tile is
    #     never mostly padding; Pallas masks the partial edge block and every
    #     output column depends only on the matching input column.
    if B <= batch_tile:
        TB = B
        n_tiles = 1
    else:
        n_tiles = pl.cdiv(B, batch_tile)
        TB = _round_up(pl.cdiv(B, n_tiles), 128)
        n_tiles = pl.cdiv(B, TB)

    # Advisory cost hint for XLA scheduling (kernel is bandwidth-bound).
    cost = pl.CostEstimate(
        flops=2 * C * C * B,
        transcendentals=0,
        bytes_accessed=4 * (C * C + C + 2 * C * B),
    )

    out = pl.pallas_call(
        toy_linear_kernel,
        out_shape=jax.ShapeDtypeStruct((C, B), jnp.float32),
        grid=(n_tiles,),
        in_specs=[
            pl.BlockSpec((C, C), lambda i: (0, 0)),    # M, resident
            pl.BlockSpec((C, 1), lambda i: (0, 0)),    # bias column, resident
            pl.BlockSpec((C, TB), lambda i: (0, i)),   # x batch tile (lanes)
        ],
        out_specs=pl.BlockSpec((C, TB), lambda i: (0, i)),
        compiler_params=pltpu.CompilerParams(
            # Batch tiles are independent -> both TensorCores on v7x megacore.
            dimension_semantics=("parallel",),
            # Plenty of headroom for double-buffered 2048-wide f32 tiles on
            # every generation (v5e/v6e/v7x).
            vmem_limit_bytes=32 * 1024 * 1024,
        ),
        cost_estimate=cost,
    )(M, bias, x)

    return out


if __name__ == "__main__":
    key = jax.random.PRNGKey(0)
    k_w, k_b, k_x = jax.random.split(key, 3)

    # Deterministic "randn"-style parameter init (as in the module __init__).
    weights = jax.random.normal(k_w, (NUM_FEATURES, NUM_CLASSES), dtype=jnp.float32)
    bias = jax.random.normal(k_b, (NUM_CLASSES, 1), dtype=jnp.float32)

    # Small example input: 8 samples, each a NUM_CLASSES-dim column vector.
    batch = 8
    x = jax.random.normal(k_x, (NUM_CLASSES, batch), dtype=jnp.float32)

    out = toy_model_linear(weights, x, bias)
    out = jax.block_until_ready(out)

    ref = weights.T @ (weights @ x) + bias
    assert out.shape == (NUM_CLASSES, batch)
    assert jnp.allclose(out, ref, atol=1e-4, rtol=1e-4)

    # Also exercise the multi-tile / ragged-edge path with a small batch_tile.
    batch2 = 300
    x2 = jax.random.normal(jax.random.PRNGKey(1), (NUM_CLASSES, batch2), dtype=jnp.float32)
    out2 = jax.block_until_ready(toy_model_linear(weights, x2, bias, batch_tile=256))
    ref2 = weights.T @ (weights @ x2) + bias
    assert out2.shape == (NUM_CLASSES, batch2)
    assert jnp.allclose(out2, ref2, atol=1e-4, rtol=1e-4)

    print("KERNEL_OK")
</pallas_src>

<mosaic_0001>
module attributes {stable_mosaic.version = 11 : i64} {
  func.func @toy_linear_kernel(%arg0: i32, %arg1: memref<100x100xf32, #tpu.memory_space<vmem>>, %arg2: memref<100x1xf32, #tpu.memory_space<vmem>>, %arg3: memref<100x8xf32, #tpu.memory_space<vmem>>, %arg4: memref<100x8xf32, #tpu.memory_space<vmem>>) attributes {dimension_semantics = [#tpu.dimension_semantics<parallel>], iteration_bounds = array<i64: 1>, scalar_prefetch = 0 : i64, scratch_operands = 0 : i64, tpu.core_type = #tpu.core_type<tc>, window_params = [{pipeline_mode = #tpu.pipeline_mode<synchronous>, transform_indices = @transform_0, window_bounds = array<i64: 100, 100>}, {pipeline_mode = #tpu.pipeline_mode<synchronous>, transform_indices = @transform_1, window_bounds = array<i64: 100, 1>}, {transform_indices = @transform_2, window_bounds = array<i64: 100, 8>}, {transform_indices = @transform_3, window_bounds = array<i64: 100, 8>}]} {
    %c0 = arith.constant 0 : index
    %c0_0 = arith.constant 0 : index
    %0 = vector.load %arg1[%c0, %c0_0] : memref<100x100xf32, #tpu.memory_space<vmem>>, vector<100x100xf32>
    %c0_1 = arith.constant 0 : index
    %c0_2 = arith.constant 0 : index
    %1 = vector.load %arg3[%c0_1, %c0_2] : memref<100x8xf32, #tpu.memory_space<vmem>>, vector<100x8xf32>
    %cst = arith.constant dense<0.000000e+00> : vector<100x8xf32>
    %2 = tpu.matmul %0, %1, %cst {dimension_numbers = #tpu.dot_dimension_numbers<[1], [0], [0], [1], [0, 0, 1, 1], [], []>} : vector<100x100xf32>, vector<100x8xf32>, vector<100x8xf32> -> vector<100x8xf32>
    %c0_3 = arith.constant 0 : index
    %c0_4 = arith.constant 0 : index
    %3 = vector.load %arg2[%c0_3, %c0_4] : memref<100x1xf32, #tpu.memory_space<vmem>>, vector<100x1xf32>
    %4 = vector.broadcast %3 : vector<100x1xf32> to vector<100x8xf32>
    %5 = arith.addf %2, %4 : vector<100x8xf32>
    %c0_5 = arith.constant 0 : index
    %c0_6 = arith.constant 0 : index
    %6 = vector.load %arg4[%c0_5, %c0_6] : memref<100x8xf32, #tpu.memory_space<vmem>>, vector<100x8xf32>
    tpu.vector_store %arg4[%c0_5, %c0_6], %5 {strides = array<i32>} : memref<100x8xf32, #tpu.memory_space<vmem>>, vector<100x8xf32>,
    return
  }
  func.func @transform_0(%arg0: i32) -> (i32, i32) {
    %c0_i32 = arith.constant 0 : i32
    %c0_i32_0 = arith.constant 0 : i32
    %c0_i32_1 = arith.constant 0 : i32
    return %c0_i32, %c0_i32_0 : i32, i32
  }
  func.func @transform_1(%arg0: i32) -> (i32, i32) {
    %c0_i32 = arith.constant 0 : i32
    %c0_i32_0 = arith.constant 0 : i32
    %c0_i32_1 = arith.constant 0 : i32
    return %c0_i32, %c0_i32_0 : i32, i32
  }
  func.func @transform_2(%arg0: i32) -> (i32, i32) {
    %c0_i32 = arith.constant 0 : i32
    %c0_i32_0 = arith.constant 0 : i32
    return %c0_i32, %arg0 : i32, i32
  }
  func.func @transform_3(%arg0: i32) -> (i32, i32) {
    %c0_i32 = arith.constant 0 : i32
    %c0_i32_0 = arith.constant 0 : i32
    return %c0_i32, %arg0 : i32, i32
  }
}

</mosaic_0001>

<llo_original>
// kernel: tpu_custom_call.1
$region0: #{tpu_custom_call.1}
  #allocation0 [shape = 'u32[]', space=smem, size = 0x4, offset = 0x4, fixed_abs, tag = 'smem constant byte address 0x4 - core index']
  #allocation1 [shape = 'u32[144,128]{1,0:T(1,128)}', space=vmem, size = 0x12000, scoped, tag = 'internal scratch']
  %s0 = inlined_call_operand.vmem [shape: f32[100,100], index: 0, kind: input, shape index: {}]
  %s1 = inlined_call_operand.vmem [shape: f32[100,1], index: 1, kind: input, shape index: {}]
  %s2 = inlined_call_operand.vmem [shape: f32[100,8], index: 2, kind: input, shape index: {}]
  %s3 = inlined_call_operand.vmem [shape: f32[100,8], index: 3, kind: output, shape index: {}]
  %s4 = sld [smem:[#allocation0]]
  $region22: #{tpu_custom_call.1} parent=0
    _
  %s6 = ssub.s32 1, %s4
  %s7 = scalar_select 0, %s6, %s4
  // Predicated region
  $region2: #{tpu_custom_call.1} parent=0 // pred_check
    _
  $region3: #{tpu_custom_call.1} parent=0 // pred_check_branch
    %9 = sbr.rel (0) target = $region5
  $region4: #{tpu_custom_call.1} parent=0 // pred_region
    _
  $region5: #{tpu_custom_call.1} parent=0 // pred_fallthru
    _
  // Predicated region
  $region6: #{tpu_custom_call.1} parent=0 // pred_check
    _
  $region7: #{tpu_custom_call.1} parent=0 // pred_check_branch
    %11 = sbr.rel (0) target = $region9
  $region8: #{tpu_custom_call.1} parent=0 // pred_region
    _
  $region9: #{tpu_custom_call.1} parent=0 // pred_fallthru
    _
  // Predicated region
  $region10: #{tpu_custom_call.1} parent=0 // pred_check
    _
  $region11: #{tpu_custom_call.1} parent=0 // pred_check_branch
    %13 = sbr.rel (0) target = $region13
  $region12: #{tpu_custom_call.1} parent=0 // pred_region
    _
  $region13: #{tpu_custom_call.1} parent=0 // pred_fallthru
    _
  %v14 = vld [vmem:[%s0] sm:$0xff]
  %v15 = vld [vmem:[%s0 + $0x8] sm:$0xff]
  %v16 = vld [vmem:[%s0 + $0x10] sm:$0xff]
  %v17 = vld [vmem:[%s0 + $0x18] sm:$0xff]
  %v18 = vld [vmem:[%s0 + $0x20] sm:$0xff]
  %v19 = vld [vmem:[%s0 + $0x28] sm:$0xff]
  %v20 = vld [vmem:[%s0 + $0x30] sm:$0xff]
  %v21 = vld [vmem:[%s0 + $0x38] sm:$0xff]
  %v22 = vld [vmem:[%s0 + $0x40] sm:$0xff]
  %v23 = vld [vmem:[%s0 + $0x48] sm:$0xff]
  %v24 = vld [vmem:[%s0 + $0x50] sm:$0xff]
  %v25 = vld [vmem:[%s0 + $0x58] sm:$0xff]
  %v26 = vld [vmem:[%s0 + $0x60] sm:$0xf]
  %v27 = vld [vmem:[%s2] sm:$0xff]
  %v28 = vld [vmem:[%s2 + $0x8] sm:$0xff]
  %v29 = vld [vmem:[%s2 + $0x10] sm:$0xff]
  %v30 = vld [vmem:[%s2 + $0x18] sm:$0xff]
  %v31 = vld [vmem:[%s2 + $0x20] sm:$0xff]
  %v32 = vld [vmem:[%s2 + $0x28] sm:$0xff]
  %v33 = vld [vmem:[%s2 + $0x30] sm:$0xff]
  %v34 = vld [vmem:[%s2 + $0x38] sm:$0xff]
  %v35 = vld [vmem:[%s2 + $0x40] sm:$0xff]
  %v36 = vld [vmem:[%s2 + $0x48] sm:$0xff]
  %v37 = vld [vmem:[%s2 + $0x50] sm:$0xff]
  %v38 = vld [vmem:[%s2 + $0x58] sm:$0xff]
  %v39 = vld [vmem:[%s2 + $0x60] sm:$0xf]
  %v40 = vld [vmem:[%s1] sm:$0xff]
  %v41 = vld [vmem:[%s1 + $0x8] sm:$0xff]
  %v42 = vld [vmem:[%s1 + $0x10] sm:$0xff]
  %v43 = vld [vmem:[%s1 + $0x18] sm:$0xff]
  %v44 = vld [vmem:[%s1 + $0x20] sm:$0xff]
  %v45 = vld [vmem:[%s1 + $0x28] sm:$0xff]
  %v46 = vld [vmem:[%s1 + $0x30] sm:$0xff]
  %v47 = vld [vmem:[%s1 + $0x38] sm:$0xff]
  %v48 = vld [vmem:[%s1 + $0x40] sm:$0xff]
  %v49 = vld [vmem:[%s1 + $0x48] sm:$0xff]
  %v50 = vld [vmem:[%s1 + $0x50] sm:$0xff]
  %v51 = vld [vmem:[%s1 + $0x58] sm:$0xff]
  %v52 = vld [vmem:[%s1 + $0x60] sm:$0xf]
  %54 = vset.pattern.permute.xlu0 0
  %55 = vperm.xlu0 %54, %v40
  %v56 = vpop.permute.xlu0 %55
  %59 = vset.pattern.permute.xlu0 0
  %60 = vperm.xlu0 %59, %v41
  %v61 = vpop.permute.xlu0 %60
  %64 = vset.pattern.permute.xlu0 0
  %65 = vperm.xlu0 %64, %v42
  %v66 = vpop.permute.xlu0 %65
  %69 = vset.pattern.permute.xlu0 0
  %70 = vperm.xlu0 %69, %v43
  %v71 = vpop.permute.xlu0 %70
  %74 = vset.pattern.permute.xlu0 0
  %75 = vperm.xlu0 %74, %v44
  %v76 = vpop.permute.xlu0 %75
  %79 = vset.pattern.permute.xlu0 0
  %80 = vperm.xlu0 %79, %v45
  %v81 = vpop.permute.xlu0 %80
  %84 = vset.pattern.permute.xlu0 0
  %85 = vperm.xlu0 %84, %v46
  %v86 = vpop.permute.xlu0 %85
  %89 = vset.pattern.permute.xlu0 0
  %90 = vperm.xlu0 %89, %v47
  %v91 = vpop.permute.xlu0 %90
  %94 = vset.pattern.permute.xlu0 0
  %95 = vperm.xlu0 %94, %v48
  %v96 = vpop.permute.xlu0 %95
  %99 = vset.pattern.permute.xlu0 0
  %100 = vperm.xlu0 %99, %v49
  %v101 = vpop.permute.xlu0 %100
  %104 = vset.pattern.permute.xlu0 0
  %105 = vperm.xlu0 %104, %v50
  %v106 = vpop.permute.xlu0 %105
  %109 = vset.pattern.permute.xlu0 0
  %110 = vperm.xlu0 %109, %v51
  %v111 = vpop.permute.xlu0 %110
  %114 = vset.pattern.permute.xlu0 0
  %115 = vperm.xlu0 %114, %v52
  %v116 = vpop.permute.xlu0 %115
  %vm118 = vcmask 818176
  %v120 = vsel %vm118, %v14, 0
  %v123 = vsel %vm118, %v15, 0
  %v126 = vsel %vm118, %v16, 0
  %v129 = vsel %vm118, %v17, 0
  %v132 = vsel %vm118, %v18, 0
  %v135 = vsel %vm118, %v19, 0
  %v138 = vsel %vm118, %v20, 0
  %v141 = vsel %vm118, %v21, 0
  %v144 = vsel %vm118, %v22, 0
  %v147 = vsel %vm118, %v23, 0
  %v150 = vsel %vm118, %v24, 0
  %v153 = vsel %vm118, %v25, 0
  %v156 = vsel %vm118, %v26, 0
  %vm158 = vcmask 1043456
  %v160 = vsel %vm158, %v39, 0
  %162 = vmatprep.subr.mxu0 0.0
  %163 = vmatpush1.msra.mxu0 %v27
  %164 = vmatprep.subr.mxu0 0.0
  %165 = vmatpush1.msra.mxu0 %v28
  %166 = vmatprep.subr.mxu0 0.0
  %167 = vmatpush1.msra.mxu0 %v29
  %168 = vmatprep.subr.mxu0 0.0
  %169 = vmatpush1.msra.mxu0 %v30
  %170 = vmatprep.subr.mxu0 0.0
  %171 = vmatpush1.msra.mxu0 %v31
  %172 = vmatprep.subr.mxu0 0.0
  %173 = vmatpush1.msra.mxu0 %v32
  %174 = vmatprep.subr.mxu0 0.0
  %175 = vmatpush1.msra.mxu0 %v33
  %176 = vmatprep.subr.mxu0 0.0
  %177 = vmatpush1.msra.mxu0 %v34
  %178 = vmatprep.subr.mxu0 0.0
  %179 = vmatpush1.msra.mxu0 %v35
  %180 = vmatprep.subr.mxu0 0.0
  %181 = vmatpush1.msra.mxu0 %v36
  %182 = vmatprep.subr.mxu0 0.0
  %183 = vmatpush1.msra.mxu0 %v37
  %184 = vmatprep.subr.mxu0 0.0
  %185 = vmatpush1.msra.mxu0 %v38
  %186 = vmatprep.subr.mxu0 0.0
  %187 = vmatpush1.msra.mxu0 %v160
  %188 = vmatprep.subr.mxu0 0.0
  %189 = vmatpush1.msra.mxu0 0.0
  %190 = vmatprep.subr.mxu0 0.0
  %191 = vmatpush1.msra.mxu0 0.0
  %192 = vmatprep.subr.mxu0 0.0
  %193 = vmatpush1.msra.mxu0 0.0
  %194 = vmatprep.subr.mxu0 0.0
  %195 = vmatpush1.msra.mxu0 0.0
  %196 = vmatprep.subr.mxu0 0.0
  %197 = vmatpush1.msra.mxu0 0.0
  %198 = vmatprep.subr.mxu0 0.0
  %199 = vmatpush1.msra.mxu0 0.0
  %200 = vmatprep.subr.mxu0 0.0
  %201 = vmatpush1.msra.mxu0 0.0
  %202 = vmatprep.subr.mxu0 0.0
  %203 = vmatpush1.msra.mxu0 0.0
  %204 = vmatprep.subr.mxu0 0.0
  %205 = vmatpush1.msra.mxu0 0.0
  %206 = vmatprep.subr.mxu0 0.0
  %207 = vmatpush1.msra.mxu0 0.0
  %208 = vmatprep.subr.mxu0 0.0
  %209 = vmatpush1.msra.mxu0 0.0
  %210 = vmatprep.subr.mxu0 0.0
  %211 = vmatpush1.msra.mxu0 0.0
  %212 = vmatprep.subr.mxu0 0.0
  %213 = vmatpush1.msra.mxu0 0.0
  %214 = vmatprep.subr.mxu0 0.0
  %215 = vmatpush1.msra.mxu0 0.0
  %216 = vmatprep.subr.mxu0 0.0
  %217 = vmatpush1.msra.mxu0 0.0
  %218 = vmatprep.subr.mxu0 0.0
  %219 = vmatpush1.msra.mxu0 0.0
  %220 = vmatprep.subr.mxu0 0.0
  %221 = vmatpush1.msra.mxu0 0.0
  %222 = vmatprep.subr.mxu0 0.0
  %223 = vmatpush1.msra.mxu0 0.0
  %224 = vmatprep.subr.mxu0 0.0
  %225 = vmatpush1.msra.mxu0 0.0
  %226 = vmatprep.mubr.f32.mxu0 0.0
  %227 = vmatmul.mubr.f32.gmra.mrb[0].mxu0 %v120
  %v228 = vpop.f32.mrb[0].mxu0
  %v229 = vadd.f32 %v56, %v228
  %v230 = vpop.f32.mrb[0].mxu0
  %231 = vmatprep.mubr.f32.mxu0 0.0
  %232 = vmatmul.mubr.f32.gmra.mrb[0].mxu0 %v123
  %v233 = vpop.f32.mrb[0].mxu0
  %v234 = vadd.f32 %v61, %v233
  %v235 = vpop.f32.mrb[0].mxu0
  %236 = vmatprep.mubr.f32.mxu0 0.0
  %237 = vmatmul.mubr.f32.gmra.mrb[0].mxu0 %v126
  %v238 = vpop.f32.mrb[0].mxu0
  %v239 = vadd.f32 %v66, %v238
  %v240 = vpop.f32.mrb[0].mxu0
  %241 = vmatprep.mubr.f32.mxu0 0.0
  %242 = vmatmul.mubr.f32.gmra.mrb[0].mxu0 %v129
  %v243 = vpop.f32.mrb[0].mxu0
  %v244 = vadd.f32 %v71, %v243
  %v245 = vpop.f32.mrb[0].mxu0
  %246 = vmatprep.mubr.f32.mxu0 0.0
  %247 = vmatmul.mubr.f32.gmra.mrb[0].mxu0 %v132
  %v248 = vpop.f32.mrb[0].mxu0
  %v249 = vadd.f32 %v76, %v248
  %v250 = vpop.f32.mrb[0].mxu0
  %251 = vmatprep.mubr.f32.mxu0 0.0
  %252 = vmatmul.mubr.f32.gmra.mrb[0].mxu0 %v135
  %v253 = vpop.f32.mrb[0].mxu0
  %v254 = vadd.f32 %v81, %v253
  %v255 = vpop.f32.mrb[0].mxu0
  %256 = vmatprep.mubr.f32.mxu0 0.0
  %257 = vmatmul.mubr.f32.gmra.mrb[0].mxu0 %v138
  %v258 = vpop.f32.mrb[0].mxu0
  %v259 = vadd.f32 %v86, %v258
  %v260 = vpop.f32.mrb[0].mxu0
  %261 = vmatprep.mubr.f32.mxu0 0.0
  %262 = vmatmul.mubr.f32.gmra.mrb[0].mxu0 %v141
  %v263 = vpop.f32.mrb[0].mxu0
  %v264 = vadd.f32 %v91, %v263
  %v265 = vpop.f32.mrb[0].mxu0
  %266 = vmatprep.mubr.f32.mxu0 0.0
  %267 = vmatmul.mubr.f32.gmra.mrb[0].mxu0 %v144
  %v268 = vpop.f32.mrb[0].mxu0
  %v269 = vadd.f32 %v96, %v268
  %v270 = vpop.f32.mrb[0].mxu0
  %271 = vmatprep.mubr.f32.mxu0 0.0
  %272 = vmatmul.mubr.f32.gmra.mrb[0].mxu0 %v147
  %v273 = vpop.f32.mrb[0].mxu0
  %v274 = vadd.f32 %v101, %v273
  %v275 = vpop.f32.mrb[0].mxu0
  %276 = vmatprep.mubr.f32.mxu0 0.0
  %277 = vmatmul.mubr.f32.gmra.mrb[0].mxu0 %v150
  %v278 = vpop.f32.mrb[0].mxu0
  %v279 = vadd.f32 %v106, %v278
  %v280 = vpop.f32.mrb[0].mxu0
  %281 = vmatprep.mubr.f32.mxu0 0.0
  %282 = vmatmul.mubr.f32.gmra.mrb[0].mxu0 %v153
  %v283 = vpop.f32.mrb[0].mxu0
  %v284 = vadd.f32 %v111, %v283
  %v285 = vpop.f32.mrb[0].mxu0
  %286 = vmatprep.mubr.f32.mxu0 0.0
  %287 = vmatmul.mubr.f32.gmra.mrb[0].mxu0 %v156
  %v288 = vpop.f32.mrb[0].mxu0
  %v289 = vadd.f32 %v116, %v288
  %v290 = vpop.f32.mrb[0].mxu0
  %291 = vdwg.mxu0
  %vm292 = vcmask 64512
  %293 = vst.msk [vmem:[%s3] sm:$0xff] %vm292, %v229
  %294 = vst.msk [vmem:[%s3 + $0x8] sm:$0xff] %vm292, %v234
  %295 = vst.msk [vmem:[%s3 + $0x10] sm:$0xff] %vm292, %v239
  %296 = vst.msk [vmem:[%s3 + $0x18] sm:$0xff] %vm292, %v244
  %297 = vst.msk [vmem:[%s3 + $0x20] sm:$0xff] %vm292, %v249
  %298 = vst.msk [vmem:[%s3 + $0x28] sm:$0xff] %vm292, %v254
  %299 = vst.msk [vmem:[%s3 + $0x30] sm:$0xff] %vm292, %v259
  %300 = vst.msk [vmem:[%s3 + $0x38] sm:$0xff] %vm292, %v264
  %301 = vst.msk [vmem:[%s3 + $0x40] sm:$0xff] %vm292, %v269
  %302 = vst.msk [vmem:[%s3 + $0x48] sm:$0xff] %vm292, %v274
  %303 = vst.msk [vmem:[%s3 + $0x50] sm:$0xff] %vm292, %v279
  %304 = vst.msk [vmem:[%s3 + $0x58] sm:$0xff] %vm292, %v284
  %vm305 = vcmask 60416
  %306 = vst.msk [vmem:[%s3 + $0x60] sm:$0xf] %vm305, %v289
  // Predicated region
  $region14: #{tpu_custom_call.1} parent=0 // pred_check
    _
  $region15: #{tpu_custom_call.1} parent=0 // pred_check_branch
    %308 = sbr.rel (0) target = $region17
  $region16: #{tpu_custom_call.1} parent=0 // pred_region
    _
  $region17: #{tpu_custom_call.1} parent=0 // pred_fallthru
    _
  // Predicated region
  $region18: #{tpu_custom_call.1} parent=0 // pred_check
    _
  $region19: #{tpu_custom_call.1} parent=0 // pred_check_branch
    %310 = sbr.rel (0) target = $region21
  $region20: #{tpu_custom_call.1} parent=0 // pred_region
    _
  $region21: #{tpu_custom_call.1} parent=0 // pred_fallthru
    _

</llo_original>
